<compile_context>
chip_gen: v7x
topology: tpu7x:2x2x1
jax: 0.10.0
libtpu: 0.0.40
codegen_flags: <defaults>
</compile_context>

<pallas_src>
import jax
import jax.numpy as jnp
from jax.experimental import pallas as pl
from jax.experimental.pallas import tpu as pltpu


def _round_up(n, m):
    return ((n + m - 1) // m) * m


def hybrid_kernel(x_ref, w1_ref, b1_ref, w2_ref, b2_ref, out_ref):
    # ---- encoding_net: Linear + ReLU (MXU + VPU) ----
    # x / w1 may be bf16 (v6e/v7x option); accumulation is always f32.
    h = jnp.dot(x_ref[...], w1_ref[...],
                preferred_element_type=jnp.float32) + b1_ref[...]     # (TB, Q)
    h = jnp.maximum(h, 0.0)

    # ---- quantum layer: <Z_i> = cos(h_i) * cos(theta_i) ----
    # cos(theta) is folded into W2 by the wrapper, so only cos(h) remains
    # (EUP transcendental, f32).
    q = jnp.cos(h)                                                    # (TB, Q)

    # ---- classical_output_net: Linear + Softmax(dim=1) ----
    w2 = w2_ref[...]
    logits = jnp.dot(q.astype(w2.dtype), w2,
                     preferred_element_type=jnp.float32) + b2_ref[...]  # (TB, L)
    m = jnp.max(logits, axis=-1, keepdims=True)
    e = jnp.exp(logits - m)
    s = jnp.sum(e, axis=-1, keepdims=True)
    # EUP approx reciprocal + one Newton step on a (TB,1) column:
    # ~f32-exact normalization without a full VALU divide.
    inv = pl.reciprocal(s, approx=True)
    inv = inv * (2.0 - s * inv)
    out_ref[...] = e * inv


def hybrid_forward(x, w1, b1, theta, w2, b2, *, batch_tile=1024,
                   matmul_dtype=jnp.float32):
    """x:(B,F), w1:(F,Q), b1:(1,Q), theta:(1,Q), w2:(Q,L), b2:(1,L) -> (B,L).

    matmul_dtype=jnp.bfloat16 is the recommended setting on v6e/v7x for large
    batches (halves the x HBM stream, native bf16 MXU path); f32 default keeps
    results bit-close to the reference.
    """
    B, F = x.shape
    Q = w1.shape[1]
    L = w2.shape[1]
    f32 = jnp.float32

    # Batch tiling: sublane-aligned tile, pad batch only if needed.
    TB = min(batch_tile, _round_up(B, 8))
    Bp = _round_up(B, TB)

    # Fold cos(theta) into W2:  q @ W2 == cos(h) @ (diag(cos theta) @ W2).
    w2_scaled = jnp.cos(theta.astype(f32)).reshape(Q, 1) * w2.astype(f32)

    xd = x.astype(f32)
    if Bp != B:
        xd = jnp.zeros((Bp, F), f32).at[:B].set(xd)

    # Optional bf16 matmul inputs (weights + streamed x); biases stay f32.
    xd = xd.astype(matmul_dtype)
    w1d = w1.astype(f32).astype(matmul_dtype)
    w2d = w2_scaled.astype(matmul_dtype)
    b1d = b1.astype(f32).reshape(1, Q)
    b2d = b2.astype(f32).reshape(1, L)

    grid = (Bp // TB,)

    isz = jnp.dtype(matmul_dtype).itemsize
    cost = pl.CostEstimate(
        flops=2 * B * (F * Q + Q * L),
        transcendentals=B * (Q + L + 1),                 # cos + exp + rcp
        bytes_accessed=(isz * (Bp * F + F * Q + Q * L)
                        + 4 * (Bp * L + Q + L)),
    )

    out = pl.pallas_call(
        hybrid_kernel,
        out_shape=jax.ShapeDtypeStruct((Bp, L), f32),
        grid=grid,
        in_specs=[
            # x: streamed per batch tile; full-extent last dim (no lane pad).
            pl.BlockSpec((TB, F), lambda i: (i, 0)),
            # Weights / biases: VMEM-resident full blocks.
            pl.BlockSpec((F, Q), lambda i: (0, 0)),      # W1
            pl.BlockSpec((1, Q), lambda i: (0, 0)),      # b1
            pl.BlockSpec((Q, L), lambda i: (0, 0)),      # diag(cos theta) @ W2
            pl.BlockSpec((1, L), lambda i: (0, 0)),      # b2
        ],
        out_specs=pl.BlockSpec((TB, L), lambda i: (i, 0)),
        compiler_params=pltpu.CompilerParams(
            dimension_semantics=("parallel",)),          # megacore on v7x
        cost_estimate=cost,
    )(xd, w1d, b1d, w2d, b2d)

    return out[:B] if Bp != B else out


def init_params(key, num_features, num_qubits, num_labels):
    """Deterministic init mimicking nn.Linear default (U(-1/sqrt(fan_in), +))."""
    k1, k2, k3, k4, k5 = jax.random.split(key, 5)
    lim1 = 1.0 / jnp.sqrt(num_features)
    w1 = jax.random.uniform(k1, (num_features, num_qubits),
                            minval=-lim1, maxval=lim1, dtype=jnp.float32)
    b1 = jax.random.uniform(k2, (1, num_qubits),
                            minval=-lim1, maxval=lim1, dtype=jnp.float32)
    # TorchConnector initializes quantum weights uniformly in [-1, 1] by default.
    theta = jax.random.uniform(k3, (1, num_qubits),
                               minval=-1.0, maxval=1.0, dtype=jnp.float32)
    lim2 = 1.0 / jnp.sqrt(num_qubits)
    w2 = jax.random.uniform(k4, (num_qubits, num_labels),
                            minval=-lim2, maxval=lim2, dtype=jnp.float32)
    b2 = jax.random.uniform(k5, (1, num_labels),
                            minval=-lim2, maxval=lim2, dtype=jnp.float32)
    return w1, b1, theta, w2, b2


def reference_forward(x, w1, b1, theta, w2, b2):
    h = jnp.maximum(x @ w1 + b1, 0.0)
    q = jnp.cos(h) * jnp.cos(theta)
    logits = q @ w2 + b2
    return jax.nn.softmax(logits, axis=1)


if __name__ == "__main__":
    B, F, Q, L = 8, 16, 8, 4   # batch, num_features, num_qubits, num_labels

    key = jax.random.PRNGKey(0)
    kx, kp = jax.random.split(key)
    x = jax.random.normal(kx, (B, F), dtype=jnp.float32)
    w1, b1, theta, w2, b2 = init_params(kp, F, Q, L)

    out = hybrid_forward(x, w1, b1, theta, w2, b2)
    out = jax.block_until_ready(out)

    ref = reference_forward(x, w1, b1, theta, w2, b2)
    assert out.shape == (B, L)
    assert jnp.allclose(out, ref, atol=1e-4, rtol=1e-4), "mismatch vs reference"
    assert jnp.allclose(jnp.sum(out, axis=1), 1.0, atol=1e-4), \
        "softmax rows must sum to 1"

    print("KERNEL_OK")
</pallas_src>

<mosaic_0001>
module attributes {stable_mosaic.version = 11 : i64} {
  func.func @hybrid_kernel(%arg0: i32, %arg1: memref<8x16xf32, #tpu.memory_space<vmem>>, %arg2: memref<16x8xf32, #tpu.memory_space<vmem>>, %arg3: memref<1x8xf32, #tpu.memory_space<vmem>>, %arg4: memref<8x4xf32, #tpu.memory_space<vmem>>, %arg5: memref<1x4xf32, #tpu.memory_space<vmem>>, %arg6: memref<8x4xf32, #tpu.memory_space<vmem>>) attributes {dimension_semantics = [#tpu.dimension_semantics<parallel>], iteration_bounds = array<i64: 1>, scalar_prefetch = 0 : i64, scratch_operands = 0 : i64, tpu.core_type = #tpu.core_type<tc>, window_params = [{transform_indices = @transform_0, window_bounds = array<i64: 8, 16>}, {pipeline_mode = #tpu.pipeline_mode<synchronous>, transform_indices = @transform_1, window_bounds = array<i64: 16, 8>}, {pipeline_mode = #tpu.pipeline_mode<synchronous>, transform_indices = @transform_2, window_bounds = array<i64: 1, 8>}, {pipeline_mode = #tpu.pipeline_mode<synchronous>, transform_indices = @transform_3, window_bounds = array<i64: 8, 4>}, {pipeline_mode = #tpu.pipeline_mode<synchronous>, transform_indices = @transform_4, window_bounds = array<i64: 1, 4>}, {transform_indices = @transform_5, window_bounds = array<i64: 8, 4>}]} {
    %c0 = arith.constant 0 : index
    %c0_0 = arith.constant 0 : index
    %0 = vector.load %arg1[%c0, %c0_0] : memref<8x16xf32, #tpu.memory_space<vmem>>, vector<8x16xf32>
    %c0_1 = arith.constant 0 : index
    %c0_2 = arith.constant 0 : index
    %1 = vector.load %arg2[%c0_1, %c0_2] : memref<16x8xf32, #tpu.memory_space<vmem>>, vector<16x8xf32>
    %cst = arith.constant dense<0.000000e+00> : vector<8x8xf32>
    %2 = tpu.matmul %0, %1, %cst {dimension_numbers = #tpu.dot_dimension_numbers<[1], [0], [0], [1], [0, 0, 1, 1], [], []>} : vector<8x16xf32>, vector<16x8xf32>, vector<8x8xf32> -> vector<8x8xf32>
    %c0_3 = arith.constant 0 : index
    %c0_4 = arith.constant 0 : index
    %3 = vector.load %arg3[%c0_3, %c0_4] : memref<1x8xf32, #tpu.memory_space<vmem>>, vector<1x8xf32>
    %4 = vector.broadcast %3 : vector<1x8xf32> to vector<8x8xf32>
    %5 = arith.addf %2, %4 : vector<8x8xf32>
    %cst_5 = arith.constant 0.000000e+00 : f32
    %6 = vector.broadcast %cst_5 : f32 to vector<8x8xf32>
    %7 = arith.maximumf %5, %6 : vector<8x8xf32>
    %8 = math.cos %7 : vector<8x8xf32>
    %c0_6 = arith.constant 0 : index
    %c0_7 = arith.constant 0 : index
    %9 = vector.load %arg4[%c0_6, %c0_7] : memref<8x4xf32, #tpu.memory_space<vmem>>, vector<8x4xf32>
    %cst_8 = arith.constant dense<0.000000e+00> : vector<8x4xf32>
    %10 = tpu.matmul %8, %9, %cst_8 {dimension_numbers = #tpu.dot_dimension_numbers<[1], [0], [0], [1], [0, 0, 1, 1], [], []>} : vector<8x8xf32>, vector<8x4xf32>, vector<8x4xf32> -> vector<8x4xf32>
    %c0_9 = arith.constant 0 : index
    %c0_10 = arith.constant 0 : index
    %11 = vector.load %arg5[%c0_9, %c0_10] : memref<1x4xf32, #tpu.memory_space<vmem>>, vector<1x4xf32>
    %12 = vector.broadcast %11 : vector<1x4xf32> to vector<8x4xf32>
    %13 = arith.addf %10, %12 : vector<8x4xf32>
    %cst_11 = arith.constant dense<0xFF800000> : vector<8xf32>
    %14 = vector.multi_reduction <maximumf>, %13, %cst_11 [1] : vector<8x4xf32> to vector<8xf32>
    %15 = vector.shape_cast %14 : vector<8xf32> to vector<8x1xf32>
    %16 = vector.broadcast %15 : vector<8x1xf32> to vector<8x4xf32>
    %17 = arith.subf %13, %16 : vector<8x4xf32>
    %18 = math.exp %17 : vector<8x4xf32>
    %cst_12 = arith.constant dense<0.000000e+00> : vector<8xf32>
    %19 = vector.multi_reduction <add>, %18, %cst_12 [1] : vector<8x4xf32> to vector<8xf32>
    %20 = vector.shape_cast %19 : vector<8xf32> to vector<8x1xf32>
    %21 = tpu.reciprocal %20 {approx = true} : vector<8x1xf32> -> vector<8x1xf32>
    %22 = arith.mulf %20, %21 : vector<8x1xf32>
    %cst_13 = arith.constant 2.000000e+00 : f32
    %23 = vector.broadcast %cst_13 : f32 to vector<8x1xf32>
    %24 = arith.subf %23, %22 : vector<8x1xf32>
    %25 = arith.mulf %21, %24 : vector<8x1xf32>
    %26 = vector.broadcast %25 : vector<8x1xf32> to vector<8x4xf32>
    %27 = arith.mulf %18, %26 : vector<8x4xf32>
    %c0_14 = arith.constant 0 : index
    %c0_15 = arith.constant 0 : index
    %28 = vector.load %arg6[%c0_14, %c0_15] : memref<8x4xf32, #tpu.memory_space<vmem>>, vector<8x4xf32>
    tpu.vector_store %arg6[%c0_14, %c0_15], %27 {strides = array<i32>} : memref<8x4xf32, #tpu.memory_space<vmem>>, vector<8x4xf32>,
    return
  }
  func.func @transform_0(%arg0: i32) -> (i32, i32) {
    %c0_i32 = arith.constant 0 : i32
    %c0_i32_0 = arith.constant 0 : i32
    return %arg0, %c0_i32 : i32, i32
  }
  func.func @transform_1(%arg0: i32) -> (i32, i32) {
    %c0_i32 = arith.constant 0 : i32
    %c0_i32_0 = arith.constant 0 : i32
    %c0_i32_1 = arith.constant 0 : i32
    return %c0_i32, %c0_i32_0 : i32, i32
  }
  func.func @transform_2(%arg0: i32) -> (i32, i32) {
    %c0_i32 = arith.constant 0 : i32
    %c0_i32_0 = arith.constant 0 : i32
    %c0_i32_1 = arith.constant 0 : i32
    return %c0_i32, %c0_i32_0 : i32, i32
  }
  func.func @transform_3(%arg0: i32) -> (i32, i32) {
    %c0_i32 = arith.constant 0 : i32
    %c0_i32_0 = arith.constant 0 : i32
    %c0_i32_1 = arith.constant 0 : i32
    return %c0_i32, %c0_i32_0 : i32, i32
  }
  func.func @transform_4(%arg0: i32) -> (i32, i32) {
    %c0_i32 = arith.constant 0 : i32
    %c0_i32_0 = arith.constant 0 : i32
    %c0_i32_1 = arith.constant 0 : i32
    return %c0_i32, %c0_i32_0 : i32, i32
  }
  func.func @transform_5(%arg0: i32) -> (i32, i32) {
    %c0_i32 = arith.constant 0 : i32
    %c0_i32_0 = arith.constant 0 : i32
    return %arg0, %c0_i32 : i32, i32
  }
}

</mosaic_0001>

<llo_original>
// kernel: tpu_custom_call.1
$region0: #{tpu_custom_call.1}
  #allocation0 [shape = 'u32[]', space=smem, size = 0x4, offset = 0x4, fixed_abs, tag = 'smem constant byte address 0x4 - core index']
  #allocation1 [shape = 'u32[144,128]{1,0:T(1,128)}', space=vmem, size = 0x12000, scoped, tag = 'internal scratch']
  %s0 = inlined_call_operand.vmem [shape: f32[8,16], index: 0, kind: input, shape index: {}]
  %s1 = inlined_call_operand.vmem [shape: f32[16,8], index: 1, kind: input, shape index: {}]
  %s2 = inlined_call_operand.vmem [shape: f32[1,8], index: 2, kind: input, shape index: {}]
  %s3 = inlined_call_operand.vmem [shape: f32[8,4], index: 3, kind: input, shape index: {}]
  %s4 = inlined_call_operand.vmem [shape: f32[1,4], index: 4, kind: input, shape index: {}]
  %s5 = inlined_call_operand.vmem [shape: f32[8,4], index: 5, kind: output, shape index: {}]
  %s6 = sld [smem:[#allocation0]]
  $region30: #{tpu_custom_call.1} parent=0
    _
  %s8 = ssub.s32 1, %s6
  %s9 = scalar_select 0, %s8, %s6
  // Predicated region
  $region2: #{tpu_custom_call.1} parent=0 // pred_check
    _
  $region3: #{tpu_custom_call.1} parent=0 // pred_check_branch
    %11 = sbr.rel (0) target = $region5
  $region4: #{tpu_custom_call.1} parent=0 // pred_region
    _
  $region5: #{tpu_custom_call.1} parent=0 // pred_fallthru
    _
  // Predicated region
  $region6: #{tpu_custom_call.1} parent=0 // pred_check
    _
  $region7: #{tpu_custom_call.1} parent=0 // pred_check_branch
    %13 = sbr.rel (0) target = $region9
  $region8: #{tpu_custom_call.1} parent=0 // pred_region
    _
  $region9: #{tpu_custom_call.1} parent=0 // pred_fallthru
    _
  // Predicated region
  $region10: #{tpu_custom_call.1} parent=0 // pred_check
    _
  $region11: #{tpu_custom_call.1} parent=0 // pred_check_branch
    %15 = sbr.rel (0) target = $region13
  $region12: #{tpu_custom_call.1} parent=0 // pred_region
    _
  $region13: #{tpu_custom_call.1} parent=0 // pred_fallthru
    _
  // Predicated region
  $region14: #{tpu_custom_call.1} parent=0 // pred_check
    _
  $region15: #{tpu_custom_call.1} parent=0 // pred_check_branch
    %17 = sbr.rel (0) target = $region17
  $region16: #{tpu_custom_call.1} parent=0 // pred_region
    _
  $region17: #{tpu_custom_call.1} parent=0 // pred_fallthru
    _
  // Predicated region
  $region18: #{tpu_custom_call.1} parent=0 // pred_check
    _
  $region19: #{tpu_custom_call.1} parent=0 // pred_check_branch
    %19 = sbr.rel (0) target = $region21
  $region20: #{tpu_custom_call.1} parent=0 // pred_region
    _
  $region21: #{tpu_custom_call.1} parent=0 // pred_fallthru
    _
  %v20 = vld [vmem:[%s0] sm:$0xff]
  %v21 = vld [vmem:[%s1] sm:$0xff]
  %v22 = vld [vmem:[%s1 + $0x8] sm:$0xff]
  %v23 = vld [vmem:[%s2] sm:$0x1]
  %v25 = vlaneseq
  %v26 = vshrl.u32 %v25, 7
  %v27 = vsub.s32 0, %v26
  %v28 = vrot.slane %v23, %v27
  %vm30 = vcmask 130048
  %v32 = vsel %vm30, %v20, 0
  %34 = vmatprep.subr.mxu0 0.0
  %35 = vmatpush1.msra.mxu0 %v21
  %36 = vmatprep.subr.mxu0 0.0
  %37 = vmatpush1.msra.mxu0 %v22
  %38 = vmatprep.subr.mxu0 0.0
  %39 = vmatpush1.msra.mxu0 0.0
  %40 = vmatprep.subr.mxu0 0.0
  %41 = vmatpush1.msra.mxu0 0.0
  %42 = vmatprep.subr.mxu0 0.0
  %43 = vmatpush1.msra.mxu0 0.0
  %44 = vmatprep.subr.mxu0 0.0
  %45 = vmatpush1.msra.mxu0 0.0
  %46 = vmatprep.subr.mxu0 0.0
  %47 = vmatpush1.msra.mxu0 0.0
  %48 = vmatprep.subr.mxu0 0.0
  %49 = vmatpush1.msra.mxu0 0.0
  %50 = vmatprep.subr.mxu0 0.0
  %51 = vmatpush1.msra.mxu0 0.0
  %52 = vmatprep.subr.mxu0 0.0
  %53 = vmatpush1.msra.mxu0 0.0
  %54 = vmatprep.subr.mxu0 0.0
  %55 = vmatpush1.msra.mxu0 0.0
  %56 = vmatprep.subr.mxu0 0.0
  %57 = vmatpush1.msra.mxu0 0.0
  %58 = vmatprep.subr.mxu0 0.0
  %59 = vmatpush1.msra.mxu0 0.0
  %60 = vmatprep.subr.mxu0 0.0
  %61 = vmatpush1.msra.mxu0 0.0
  %62 = vmatprep.subr.mxu0 0.0
  %63 = vmatpush1.msra.mxu0 0.0
  %64 = vmatprep.subr.mxu0 0.0
  %65 = vmatpush1.msra.mxu0 0.0
  %66 = vmatprep.subr.mxu0 0.0
  %67 = vmatpush1.msra.mxu0 0.0
  %68 = vmatprep.subr.mxu0 0.0
  %69 = vmatpush1.msra.mxu0 0.0
  %70 = vmatprep.subr.mxu0 0.0
  %71 = vmatpush1.msra.mxu0 0.0
  %72 = vmatprep.subr.mxu0 0.0
  %73 = vmatpush1.msra.mxu0 0.0
  %74 = vmatprep.subr.mxu0 0.0
  %75 = vmatpush1.msra.mxu0 0.0
  %76 = vmatprep.subr.mxu0 0.0
  %77 = vmatpush1.msra.mxu0 0.0
  %78 = vmatprep.subr.mxu0 0.0
  %79 = vmatpush1.msra.mxu0 0.0
  %80 = vmatprep.subr.mxu0 0.0
  %81 = vmatpush1.msra.mxu0 0.0
  %82 = vmatprep.subr.mxu0 0.0
  %83 = vmatpush1.msra.mxu0 0.0
  %84 = vmatprep.subr.mxu0 0.0
  %85 = vmatpush1.msra.mxu0 0.0
  %86 = vmatprep.subr.mxu0 0.0
  %87 = vmatpush1.msra.mxu0 0.0
  %88 = vmatprep.subr.mxu0 0.0
  %89 = vmatpush1.msra.mxu0 0.0
  %90 = vmatprep.subr.mxu0 0.0
  %91 = vmatpush1.msra.mxu0 0.0
  %92 = vmatprep.subr.mxu0 0.0
  %93 = vmatpush1.msra.mxu0 0.0
  %94 = vmatprep.subr.mxu0 0.0
  %95 = vmatpush1.msra.mxu0 0.0
  %96 = vmatprep.subr.mxu0 0.0
  %97 = vmatpush1.msra.mxu0 0.0
  %98 = vmatprep.mubr.f32.mxu0 0.0
  %99 = vmatmul.mubr.f32.gmra.mrb[0].mxu0 %v32
  %v100 = vpop.f32.mrb[0].mxu0
  %v101 = vadd.f32 %v28, %v100
  %v102 = vpop.f32.mrb[0].mxu0
  %103 = vdwg.mxu0
  %v104 = vmax.f32 %v101, 0.0
  %v105 = vand.u32 2147483647, %v104
  %vm106 = vcmp.le.f32.partialorder %v105, 0.7853982
  %vm107 = vcmp.lt.s32.totalorder %v104, 0
  %v108 = vand.u32 %v104, 2139095040
  %v109 = vshrl.u32 %v108, 23
  %v110 = vsub.s32 %v109, 127
  %v111 = vand.u32 2147483647, %v104
  %v112 = vand.u32 %v111, 8388607
  %v113 = vor.u32 %v112, 8388608
  %v114 = vsub.s32 0, %v113
  %v115 = vadd.s32 %v110, 1
  %vm116 = vcmp.gt.s32.totalorder %v115, 0
  %v117 = vsel %vm116, %v115, 0
  %v118 = vshrl.u32 %v117, 5
  %v119 = vand.u32 %v117, 31
  %v120 = vsub.s32 32, %v119
  %v121 = vshrl.u32 683565275, %v120
  %v122 = vshll.u32 683565275, %v119
  %v123 = vshrl.u32 2475754826, %v120
  %v124 = vor.u32 %v122, %v123
  %v125 = vshll.u32 2475754826, %v119
  %v126 = vshrl.u32 2131351028, %v120
  %v127 = vor.u32 %v125, %v126
  %v128 = vshll.u32 2131351028, %v119
  %v129 = vshrl.u32 2102212464, %v120
  %v130 = vor.u32 %v128, %v129
  %v131 = vshll.u32 2102212464, %v119
  %v132 = vshrl.u32 920167782, %v120
  %v133 = vor.u32 %v131, %v132
  %v134 = vshll.u32 920167782, %v119
  %v135 = vshrl.u32 1326507024, %v120
  %v136 = vor.u32 %v134, %v135
  %vm137 = vcmp.lt.s32.totalorder %v118, 1
  %vm138 = vcmp.lt.s32.totalorder %v118, 2
  %vm139 = vcmp.lt.s32.totalorder %v118, 3
  %vm140 = vcmp.lt.s32.totalorder %v118, 4
  %v141 = vsel %vm137, %v121, %v124
  %v142 = vsel %vm140, %v130, 2102212464
  %v143 = vsel %vm139, %v127, %v142
  %v144 = vsel %vm138, %v141, %v143
  %v145 = vsel %vm137, %v124, %v127
  %v146 = vsel %vm140, %v133, 920167782
  %v147 = vsel %vm139, %v130, %v146
  %v148 = vsel %vm138, %v145, %v147
  %v149 = vsel %vm137, %v127, %v130
  %v150 = vsel %vm140, %v136, 1326507024
  %v151 = vsel %vm139, %v133, %v150
  %v152 = vsel %vm138, %v149, %v151
  %v153 = vshll.u32 %v113, 8
  %v154 = vmul.u32.u64.compose %v153, %v152
  %v155 = vextract.low.u32 %v154
  %v156 = vextract.high.u32 %v154
  %v157 = vmul.u32.u64.compose %v153, %v148
  %v158 = vextract.low.u32 %v157
  %v159 = vextract.high.u32 %v157
  %v160 = vmul.u32 %v153, %v144
  %v161 = vadd.s32 %v156, %v158
  %vm162 = vc.u32 %v156, %v158
  %v163 = vadd.s32 %v159, 1
  %v164 = vsel %vm162, %v163, %v159
  %v165 = vadd.s32 %v160, %v164
  %v166 = vadd.s32 %v165, 536870912
  %v167 = vshrl.u32 %v166, 30
  %v168 = vshll.u32 %v167, 30
  %v169 = vsub.s32 %v165, %v168
  %vm170 = vcmp.lt.s32.totalorder %v169, 0
  %v171 = vsub.s32 0, %v169
  %v172 = vsel %vm170, %v171, %v169
  %v173 = vclz %v172
  %v174 = vsub.s32 %v173, 2
  %vm175 = vcmp.gt.s32.totalorder 0, %v174
  %v176 = vsel %vm175, 0, %v174
  %v177 = vsub.s32 32, %v176
  %v178 = vshll.u32 %v169, %v176
  %v179 = vshrl.u32 %v161, %v177
  %v180 = vor.u32 %v178, %v179
  %v181 = vsub.s32 4294967266, %v176
  %v182 = vadd.s32 %v181, 127
  %v183 = vshll.u32 %v182, 23
  %v184 = vor.u32 4788187, %v183
  %v185 = vand.u32 2147483647, %v184
  %v187 = vcvt.s32.f32 %v180
  %v188 = vmul.f32 %v187, %v185
  %v189 = vxor.u32 %v188, 2147483648
  %v190 = vsel %vm107, %v189, %v188
  %v191 = vsub.s32 4, %v167
  %v192 = vsel %vm107, %v191, %v167
  %v193 = vsel %vm106, %v104, %v190
  %v194 = vsel %vm106, 0, %v192
  %v195 = vcosq.f32.pop %v193
  %v196 = vsinq.f32.pop %v193
  %vm197 = vweird.f32 %v104
  %v198 = vand.u32 %v194, 3
  %vm199 = vcmp.lt.s32.totalorder %v198, 2
  %vm200 = vcmp.eq.s32.totalorder %v198, 0
  %v201 = vxor.u32 %v196, 2147483648
  %v202 = vsel %vm200, %v195, %v201
  %vm203 = vcmp.eq.s32.totalorder %v198, 2
  %v204 = vxor.u32 %v195, 2147483648
  %v205 = vsel %vm203, %v204, %v196
  %v206 = vsel %vm199, %v202, %v205
  %v207 = vsel %vm197, nan, %v206
  %v208 = vld [vmem:[%s3] sm:$0xff]
  %v209 = vld [vmem:[%s4] sm:$0x1]
  %v211 = vlaneseq
  %v212 = vshrl.u32 %v211, 7
  %v213 = vsub.s32 0, %v212
  %v214 = vrot.slane %v209, %v213
  %vm216 = vcmask 64512
  %v218 = vsel %vm216, %v207, 0
  %220 = vmatprep.subr.mxu0 0.0
  %221 = vmatpush1.msra.mxu0 %v208
  %222 = vmatprep.subr.mxu0 0.0
  %223 = vmatpush1.msra.mxu0 0.0
  %224 = vmatprep.subr.mxu0 0.0
  %225 = vmatpush1.msra.mxu0 0.0
  %226 = vmatprep.subr.mxu0 0.0
  %227 = vmatpush1.msra.mxu0 0.0
  %228 = vmatprep.subr.mxu0 0.0
  %229 = vmatpush1.msra.mxu0 0.0
  %230 = vmatprep.subr.mxu0 0.0
  %231 = vmatpush1.msra.mxu0 0.0
  %232 = vmatprep.subr.mxu0 0.0
  %233 = vmatpush1.msra.mxu0 0.0
  %234 = vmatprep.subr.mxu0 0.0
  %235 = vmatpush1.msra.mxu0 0.0
  %236 = vmatprep.subr.mxu0 0.0
  %237 = vmatpush1.msra.mxu0 0.0
  %238 = vmatprep.subr.mxu0 0.0
  %239 = vmatpush1.msra.mxu0 0.0
  %240 = vmatprep.subr.mxu0 0.0
  %241 = vmatpush1.msra.mxu0 0.0
  %242 = vmatprep.subr.mxu0 0.0
  %243 = vmatpush1.msra.mxu0 0.0
  %244 = vmatprep.subr.mxu0 0.0
  %245 = vmatpush1.msra.mxu0 0.0
  %246 = vmatprep.subr.mxu0 0.0
  %247 = vmatpush1.msra.mxu0 0.0
  %248 = vmatprep.subr.mxu0 0.0
  %249 = vmatpush1.msra.mxu0 0.0
  %250 = vmatprep.subr.mxu0 0.0
  %251 = vmatpush1.msra.mxu0 0.0
  %252 = vmatprep.subr.mxu0 0.0
  %253 = vmatpush1.msra.mxu0 0.0
  %254 = vmatprep.subr.mxu0 0.0
  %255 = vmatpush1.msra.mxu0 0.0
  %256 = vmatprep.subr.mxu0 0.0
  %257 = vmatpush1.msra.mxu0 0.0
  %258 = vmatprep.subr.mxu0 0.0
  %259 = vmatpush1.msra.mxu0 0.0
  %260 = vmatprep.subr.mxu0 0.0
  %261 = vmatpush1.msra.mxu0 0.0
  %262 = vmatprep.subr.mxu0 0.0
  %263 = vmatpush1.msra.mxu0 0.0
  %264 = vmatprep.subr.mxu0 0.0
  %265 = vmatpush1.msra.mxu0 0.0
  %266 = vmatprep.subr.mxu0 0.0
  %267 = vmatpush1.msra.mxu0 0.0
  %268 = vmatprep.subr.mxu0 0.0
  %269 = vmatpush1.msra.mxu0 0.0
  %270 = vmatprep.subr.mxu0 0.0
  %271 = vmatpush1.msra.mxu0 0.0
  %272 = vmatprep.subr.mxu0 0.0
  %273 = vmatpush1.msra.mxu0 0.0
  %274 = vmatprep.subr.mxu0 0.0
  %275 = vmatpush1.msra.mxu0 0.0
  %276 = vmatprep.subr.mxu0 0.0
  %277 = vmatpush1.msra.mxu0 0.0
  %278 = vmatprep.subr.mxu0 0.0
  %279 = vmatpush1.msra.mxu0 0.0
  %280 = vmatprep.subr.mxu0 0.0
  %281 = vmatpush1.msra.mxu0 0.0
  %282 = vmatprep.subr.mxu0 0.0
  %283 = vmatpush1.msra.mxu0 0.0
  %284 = vmatprep.mubr.f32.mxu0 0.0
  %285 = vmatmul.mubr.f32.gmra.mrb[0].mxu0 %v218
  %v286 = vpop.f32.mrb[0].mxu0
  %v287 = vadd.f32 %v214, %v286
  %v288 = vpop.f32.mrb[0].mxu0
  %289 = vdwg.mxu0
  %vm290 = vcmask 31744
  %v291 = vsel %vm290, %v287, -inf
  %292 = vmax.xlane.f32.xlu0 %v291
  %v293 = vpop.xlane.xlu0 %292
  %v294 = vsub.f32 %v287, %v293
  %v295 = vmul.f32 %v294, 1.442695
  %v296 = vpow.pop %v295
  %v297 = vsel %vm290, %v296, 0.0
  %298 = vadd.xlane.f32.xlu0 %v297
  %v299 = vpop.xlane.xlu0 %298
  %v300 = vrcp.pop %v299
  %v301 = vmul.f32 %v299, %v300
  %v302 = vsub.f32 2.0, %v301
  %v303 = vmul.f32 %v300, %v302
  %v304 = vmul.f32 %v296, %v303
  %305 = vst.msk [vmem:[%s5] sm:$0xff] %vm290, %v304
  // Predicated region
  $region22: #{tpu_custom_call.1} parent=0 // pred_check
    _
  $region23: #{tpu_custom_call.1} parent=0 // pred_check_branch
    %307 = sbr.rel (0) target = $region25
  $region24: #{tpu_custom_call.1} parent=0 // pred_region
    _
  $region25: #{tpu_custom_call.1} parent=0 // pred_fallthru
    _
  // Predicated region
  $region26: #{tpu_custom_call.1} parent=0 // pred_check
    _
  $region27: #{tpu_custom_call.1} parent=0 // pred_check_branch
    %309 = sbr.rel (0) target = $region29
  $region28: #{tpu_custom_call.1} parent=0 // pred_region
    _
  $region29: #{tpu_custom_call.1} parent=0 // pred_fallthru
    _

</llo_original>
